<compile_context>
chip_gen: v7x
topology: tpu7x:2x2x1
jax: 0.10.0
libtpu: 0.0.40
codegen_flags: <defaults>
</compile_context>

<pallas_src>
import jax
import jax.numpy as jnp
import numpy as np
from jax.experimental import pallas as pl
from jax.experimental.pallas import tpu as pltpu


# ---------------------------------------------------------------------------
# In-kernel exact-GELU helper (PyTorch nn.GELU default uses the erf form).
# Mosaic may not lower lax.erf, so use the Abramowitz-Stegun 7.1.26 polynomial
# (max abs error ~1.5e-7) built from mul/add/exp/abs + EUP reciprocal.
# ---------------------------------------------------------------------------
def _erf(x):
    p = 0.3275911
    a1, a2, a3, a4, a5 = (0.254829592, -0.284496736, 1.421413741,
                          -1.453152027, 1.061405429)
    ax = jnp.abs(x)
    # reciprocal on the EUP slot instead of a VALU divide.
    t = pl.reciprocal(1.0 + p * ax, approx=True)
    poly = ((((a5 * t + a4) * t + a3) * t + a2) * t + a1) * t
    y = 1.0 - poly * jnp.exp(-ax * ax)
    return jnp.where(x >= 0.0, y, -y)


def _gelu_exact(x):
    return 0.5 * x * (1.0 + _erf(x * 0.7071067811865476))


# ---------------------------------------------------------------------------
# Pallas kernel: one row-tile of the fused forward pass.
# ---------------------------------------------------------------------------
def odefunc_kernel(y_ref, lidar_ref, ego23_ref,
                   wn1_ref, bn1_ref, wn2_ref, bn2_ref,
                   wf1_ref, bf1_ref, wf2_ref, bf2_ref,
                   out_ref):
    # net (build_mlp): Linear(4,64) -> GELU(erf) -> Linear(64,30).  Kept in f32
    # (tiny matmuls; g feeds the output directly via g[:, 0:2]).
    h = jnp.dot(y_ref[...], wn1_ref[...],
                preferred_element_type=jnp.float32) + bn1_ref[...]
    h = _gelu_exact(h)
    g = jnp.dot(h, wn2_ref[...],
                preferred_element_type=jnp.float32) + bn2_ref[...]

    # _fc: Linear(100,200) -> Tanh -> Linear(200,12).  bf16 MXU operands,
    # f32 accumulation; tanh in f32.
    xh = jnp.dot(lidar_ref[...], wf1_ref[...],
                 preferred_element_type=jnp.float32) + bf1_ref[...]
    xh = jnp.tanh(xh)
    x = jnp.dot(xh.astype(jnp.bfloat16), wf2_ref[...],
                preferred_element_type=jnp.float32) + bf2_ref[...]

    ego23 = ego23_ref[...]

    # u1 = g[:, 2:16], u2 = g[:, 16:30]; sensor = [x (12), ego[...,2:4] (2)].
    # Split the reduction instead of concatenating x and ego23 along lanes.
    o1 = (jnp.sum(g[:, 2:14] * x, axis=-1, keepdims=True)
          + jnp.sum(g[:, 14:16] * ego23, axis=-1, keepdims=True))
    o2 = (jnp.sum(g[:, 16:28] * x, axis=-1, keepdims=True)
          + jnp.sum(g[:, 28:30] * ego23, axis=-1, keepdims=True))

    out_ref[...] = jnp.concatenate([o1, o2], axis=-1) + g[:, 0:2]


def _round_up(n, m):
    return ((n + m - 1) // m) * m


# ---------------------------------------------------------------------------
# Wrapper: reshape (T,B,·) -> (N,·), pad N to a tile multiple, pallas_call,
# slice + reshape back.
# ---------------------------------------------------------------------------
def odefunc_forward(y, lidar, ego, params, *, tile=512):
    T, B, Dy = y.shape
    Dl = lidar.shape[-1]
    N = T * B

    # Adaptive tile: no dead 512-row compute for tiny N, full tiles for big N.
    tile = min(tile, _round_up(N, 8))

    y2 = y.reshape(N, Dy).astype(jnp.float32)
    lidar2 = lidar.reshape(N, Dl).astype(jnp.bfloat16)       # dominant HBM stream -> bf16
    ego23 = ego.reshape(N, ego.shape[-1])[:, 2:4].astype(jnp.float32)

    grid = pl.cdiv(N, tile)
    Np = grid * tile
    pad = Np - N
    if pad:
        y2 = jnp.pad(y2, ((0, pad), (0, 0)))
        lidar2 = jnp.pad(lidar2, ((0, pad), (0, 0)))
        ego23 = jnp.pad(ego23, ((0, pad), (0, 0)))

    wn1 = params["wn1"].astype(jnp.float32)
    bn1 = params["bn1"].astype(jnp.float32)
    wn2 = params["wn2"].astype(jnp.float32)
    bn2 = params["bn2"].astype(jnp.float32)
    wf1 = params["wf1"].astype(jnp.bfloat16)                  # bf16 MXU operands
    bf1 = params["bf1"].astype(jnp.float32)
    wf2 = params["wf2"].astype(jnp.bfloat16)
    bf2 = params["bf2"].astype(jnp.float32)

    row_spec = lambda cols: pl.BlockSpec((tile, cols), lambda i: (i, 0))
    full_spec = lambda arr: pl.BlockSpec(arr.shape, lambda i: (0, 0))

    out = pl.pallas_call(
        odefunc_kernel,
        out_shape=jax.ShapeDtypeStruct((Np, 2), jnp.float32),
        grid_spec=pltpu.PrefetchScalarGridSpec(
            num_scalar_prefetch=0,
            grid=(grid,),
            in_specs=[
                row_spec(Dy),                      # y
                row_spec(Dl),                      # lidar (bf16)
                row_spec(2),                       # ego[..., 2:4]
                full_spec(wn1), full_spec(bn1),
                full_spec(wn2), full_spec(bn2),
                full_spec(wf1), full_spec(bf1),
                full_spec(wf2), full_spec(bf2),
            ],
            out_specs=pl.BlockSpec((tile, 2), lambda i: (i, 0)),
        ),
        compiler_params=pltpu.CompilerParams(
            dimension_semantics=("parallel",)),    # shards grid across TCs on v7x
    )(y2, lidar2, ego23, wn1, bn1, wn2, bn2, wf1, bf1, wf2, bf2)

    return out[:N].reshape(T, B, 2)


# ---------------------------------------------------------------------------
# Pure-JAX f32 reference (exact erf GELU) for validation.
# ---------------------------------------------------------------------------
def odefunc_reference(y, lidar, ego, p):
    h = jnp.dot(y, p["wn1"]) + p["bn1"][0]
    h = 0.5 * h * (1.0 + jax.scipy.special.erf(h / jnp.sqrt(2.0)))
    g = jnp.dot(h, p["wn2"]) + p["bn2"][0]
    xh = jnp.tanh(jnp.dot(lidar, p["wf1"]) + p["bf1"][0])
    x = jnp.dot(xh, p["wf2"]) + p["bf2"][0]
    sensor = jnp.concatenate([x, ego[..., 2:4]], axis=-1)
    u1 = g[..., 2:16]
    u2 = g[..., 16:30]
    o1 = jnp.sum(u1 * sensor, axis=-1, keepdims=True)
    o2 = jnp.sum(u2 * sensor, axis=-1, keepdims=True)
    return jnp.concatenate([o1, o2], axis=-1) + g[..., 0:2]


# ---------------------------------------------------------------------------
# Deterministic parameter init (synthetic; mirrors __init__ shapes:
# fc_param=[4,64,30] MLP with normal(0,0.1)/zero-bias init, _fc=(100->200->12)).
# Weights stored (in, out) so x @ W == PyTorch's x @ weight.T.
# ---------------------------------------------------------------------------
def init_params(key):
    ks = jax.random.split(key, 4)
    return {
        "wn1": 0.1 * jax.random.normal(ks[0], (4, 64), jnp.float32),
        "bn1": jnp.zeros((1, 64), jnp.float32),
        "wn2": 0.1 * jax.random.normal(ks[1], (64, 30), jnp.float32),
        "bn2": jnp.zeros((1, 30), jnp.float32),
        "wf1": 0.1 * jax.random.normal(ks[2], (100, 200), jnp.float32),
        "bf1": jnp.zeros((1, 200), jnp.float32),
        "wf2": 0.1 * jax.random.normal(ks[3], (200, 12), jnp.float32),
        "bf2": jnp.zeros((1, 12), jnp.float32),
    }


if __name__ == "__main__":
    key = jax.random.PRNGKey(0)
    kp, ky, kl, ke = jax.random.split(key, 4)

    params = init_params(kp)

    # --- small demo shape (single grid step) -------------------------------
    T, B = 4, 2                       # (time, batch)
    y = jax.random.normal(ky, (T, B, 4), jnp.float32)         # ODE state
    lidar = jax.random.uniform(kl, (T, B, 100), jnp.float32)  # lidar / 200.0 style input
    ego = jax.random.normal(ke, (T, B, 4), jnp.float32)       # ego state (x, y, theta, v)

    out = odefunc_forward(y, lidar, ego, params)
    out = jax.block_until_ready(out)
    ref = odefunc_reference(y, lidar, ego, params)
    # Tolerance re-baselined for bf16 matmul operands on the _fc path and the
    # approx EUP reciprocal inside the erf polynomial.
    np.testing.assert_allclose(np.asarray(out), np.asarray(ref),
                               rtol=2e-2, atol=2e-2)
    assert out.shape == (T, B, 2)

    # --- multi-tile + padding path (grid > 1, N not a tile multiple) -------
    T2, B2 = 5, 5                     # N = 25 -> pads to 32 with tile=8
    ky2, kl2, ke2 = jax.random.split(jax.random.PRNGKey(1), 3)
    y_b = jax.random.normal(ky2, (T2, B2, 4), jnp.float32)
    lidar_b = jax.random.uniform(kl2, (T2, B2, 100), jnp.float32)
    ego_b = jax.random.normal(ke2, (T2, B2, 4), jnp.float32)

    out_b = odefunc_forward(y_b, lidar_b, ego_b, params, tile=8)
    out_b = jax.block_until_ready(out_b)
    ref_b = odefunc_reference(y_b, lidar_b, ego_b, params)
    np.testing.assert_allclose(np.asarray(out_b), np.asarray(ref_b),
                               rtol=2e-2, atol=2e-2)
    assert out_b.shape == (T2, B2, 2)

    print("KERNEL_OK")
</pallas_src>

<mosaic_0001>
module attributes {stable_mosaic.version = 11 : i64} {
  func.func @odefunc_kernel(%arg0: i32, %arg1: memref<8x4xf32, #tpu.memory_space<vmem>>, %arg2: memref<8x100xbf16, #tpu.memory_space<vmem>>, %arg3: memref<8x2xf32, #tpu.memory_space<vmem>>, %arg4: memref<4x64xf32, #tpu.memory_space<vmem>>, %arg5: memref<1x64xf32, #tpu.memory_space<vmem>>, %arg6: memref<64x30xf32, #tpu.memory_space<vmem>>, %arg7: memref<1x30xf32, #tpu.memory_space<vmem>>, %arg8: memref<100x200xbf16, #tpu.memory_space<vmem>>, %arg9: memref<1x200xf32, #tpu.memory_space<vmem>>, %arg10: memref<200x12xbf16, #tpu.memory_space<vmem>>, %arg11: memref<1x12xf32, #tpu.memory_space<vmem>>, %arg12: memref<8x2xf32, #tpu.memory_space<vmem>>) attributes {dimension_semantics = [#tpu.dimension_semantics<parallel>], iteration_bounds = array<i64: 1>, scalar_prefetch = 0 : i64, scratch_operands = 0 : i64, tpu.core_type = #tpu.core_type<tc>, window_params = [{transform_indices = @transform_0, window_bounds = array<i64: 8, 4>}, {transform_indices = @transform_1, window_bounds = array<i64: 8, 100>}, {transform_indices = @transform_2, window_bounds = array<i64: 8, 2>}, {pipeline_mode = #tpu.pipeline_mode<synchronous>, transform_indices = @transform_3, window_bounds = array<i64: 4, 64>}, {pipeline_mode = #tpu.pipeline_mode<synchronous>, transform_indices = @transform_4, window_bounds = array<i64: 1, 64>}, {pipeline_mode = #tpu.pipeline_mode<synchronous>, transform_indices = @transform_5, window_bounds = array<i64: 64, 30>}, {pipeline_mode = #tpu.pipeline_mode<synchronous>, transform_indices = @transform_6, window_bounds = array<i64: 1, 30>}, {pipeline_mode = #tpu.pipeline_mode<synchronous>, transform_indices = @transform_7, window_bounds = array<i64: 100, 200>}, {pipeline_mode = #tpu.pipeline_mode<synchronous>, transform_indices = @transform_8, window_bounds = array<i64: 1, 200>}, {pipeline_mode = #tpu.pipeline_mode<synchronous>, transform_indices = @transform_9, window_bounds = array<i64: 200, 12>}, {pipeline_mode = #tpu.pipeline_mode<synchronous>, transform_indices = @transform_10, window_bounds = array<i64: 1, 12>}, {transform_indices = @transform_11, window_bounds = array<i64: 8, 2>}]} {
    %c0 = arith.constant 0 : index
    %c0_0 = arith.constant 0 : index
    %0 = vector.load %arg1[%c0, %c0_0] : memref<8x4xf32, #tpu.memory_space<vmem>>, vector<8x4xf32>
    %c0_1 = arith.constant 0 : index
    %c0_2 = arith.constant 0 : index
    %1 = vector.load %arg4[%c0_1, %c0_2] : memref<4x64xf32, #tpu.memory_space<vmem>>, vector<4x64xf32>
    %cst = arith.constant dense<0.000000e+00> : vector<8x64xf32>
    %2 = tpu.matmul %0, %1, %cst {dimension_numbers = #tpu.dot_dimension_numbers<[1], [0], [0], [1], [0, 0, 1, 1], [], []>} : vector<8x4xf32>, vector<4x64xf32>, vector<8x64xf32> -> vector<8x64xf32>
    %c0_3 = arith.constant 0 : index
    %c0_4 = arith.constant 0 : index
    %3 = vector.load %arg5[%c0_3, %c0_4] : memref<1x64xf32, #tpu.memory_space<vmem>>, vector<1x64xf32>
    %4 = vector.broadcast %3 : vector<1x64xf32> to vector<8x64xf32>
    %5 = arith.addf %2, %4 : vector<8x64xf32>
    %cst_5 = arith.constant 5.000000e-01 : f32
    %6 = vector.broadcast %cst_5 : f32 to vector<8x64xf32>
    %7 = arith.mulf %6, %5 : vector<8x64xf32>
    %cst_6 = arith.constant 0.707106769 : f32
    %8 = vector.broadcast %cst_6 : f32 to vector<8x64xf32>
    %9 = arith.mulf %5, %8 : vector<8x64xf32>
    %10 = math.absf %9 : vector<8x64xf32>
    %cst_7 = arith.constant 0.327591091 : f32
    %11 = vector.broadcast %cst_7 : f32 to vector<8x64xf32>
    %12 = arith.mulf %11, %10 : vector<8x64xf32>
    %cst_8 = arith.constant 1.000000e+00 : f32
    %13 = vector.broadcast %cst_8 : f32 to vector<8x64xf32>
    %14 = arith.addf %13, %12 : vector<8x64xf32>
    %15 = tpu.reciprocal %14 {approx = true} : vector<8x64xf32> -> vector<8x64xf32>
    %cst_9 = arith.constant 1.06140542 : f32
    %16 = vector.broadcast %cst_9 : f32 to vector<8x64xf32>
    %17 = arith.mulf %16, %15 : vector<8x64xf32>
    %cst_10 = arith.constant -1.45315206 : f32
    %18 = vector.broadcast %cst_10 : f32 to vector<8x64xf32>
    %19 = arith.addf %17, %18 : vector<8x64xf32>
    %20 = arith.mulf %19, %15 : vector<8x64xf32>
    %cst_11 = arith.constant 1.42141378 : f32
    %21 = vector.broadcast %cst_11 : f32 to vector<8x64xf32>
    %22 = arith.addf %20, %21 : vector<8x64xf32>
    %23 = arith.mulf %22, %15 : vector<8x64xf32>
    %cst_12 = arith.constant -0.284496725 : f32
    %24 = vector.broadcast %cst_12 : f32 to vector<8x64xf32>
    %25 = arith.addf %23, %24 : vector<8x64xf32>
    %26 = arith.mulf %25, %15 : vector<8x64xf32>
    %cst_13 = arith.constant 0.254829586 : f32
    %27 = vector.broadcast %cst_13 : f32 to vector<8x64xf32>
    %28 = arith.addf %26, %27 : vector<8x64xf32>
    %29 = arith.mulf %28, %15 : vector<8x64xf32>
    %cst_14 = arith.constant 0.000000e+00 : f32
    %30 = vector.broadcast %cst_14 : f32 to vector<8x64xf32>
    %31 = arith.subf %30, %10 : vector<8x64xf32>
    %32 = arith.mulf %31, %10 : vector<8x64xf32>
    %33 = math.exp %32 : vector<8x64xf32>
    %34 = arith.mulf %29, %33 : vector<8x64xf32>
    %cst_15 = arith.constant 1.000000e+00 : f32
    %35 = vector.broadcast %cst_15 : f32 to vector<8x64xf32>
    %36 = arith.subf %35, %34 : vector<8x64xf32>
    %cst_16 = arith.constant 0.000000e+00 : f32
    %37 = vector.broadcast %cst_16 : f32 to vector<8x64xf32>
    %38 = arith.cmpf oge, %9, %37 : vector<8x64xf32>
    %cst_17 = arith.constant 0.000000e+00 : f32
    %39 = vector.broadcast %cst_17 : f32 to vector<8x64xf32>
    %40 = arith.subf %39, %36 : vector<8x64xf32>
    %41 = arith.select %38, %36, %40 : vector<8x64xi1>, vector<8x64xf32>
    %cst_18 = arith.constant 1.000000e+00 : f32
    %42 = vector.broadcast %cst_18 : f32 to vector<8x64xf32>
    %43 = arith.addf %42, %41 : vector<8x64xf32>
    %44 = arith.mulf %7, %43 : vector<8x64xf32>
    %c0_19 = arith.constant 0 : index
    %c0_20 = arith.constant 0 : index
    %45 = vector.load %arg6[%c0_19, %c0_20] : memref<64x30xf32, #tpu.memory_space<vmem>>, vector<64x30xf32>
    %cst_21 = arith.constant dense<0.000000e+00> : vector<8x30xf32>
    %46 = tpu.matmul %44, %45, %cst_21 {dimension_numbers = #tpu.dot_dimension_numbers<[1], [0], [0], [1], [0, 0, 1, 1], [], []>} : vector<8x64xf32>, vector<64x30xf32>, vector<8x30xf32> -> vector<8x30xf32>
    %c0_22 = arith.constant 0 : index
    %c0_23 = arith.constant 0 : index
    %47 = vector.load %arg7[%c0_22, %c0_23] : memref<1x30xf32, #tpu.memory_space<vmem>>, vector<1x30xf32>
    %48 = vector.broadcast %47 : vector<1x30xf32> to vector<8x30xf32>
    %49 = arith.addf %46, %48 : vector<8x30xf32>
    %c0_24 = arith.constant 0 : index
    %c0_25 = arith.constant 0 : index
    %50 = vector.load %arg2[%c0_24, %c0_25] : memref<8x100xbf16, #tpu.memory_space<vmem>>, vector<8x100xbf16>
    %c0_26 = arith.constant 0 : index
    %c0_27 = arith.constant 0 : index
    %51 = vector.load %arg8[%c0_26, %c0_27] : memref<100x200xbf16, #tpu.memory_space<vmem>>, vector<100x200xbf16>
    %cst_28 = arith.constant dense<0.000000e+00> : vector<8x200xf32>
    %52 = tpu.matmul %50, %51, %cst_28 {dimension_numbers = #tpu.dot_dimension_numbers<[1], [0], [0], [1], [0, 0, 1, 1], [], []>} : vector<8x100xbf16>, vector<100x200xbf16>, vector<8x200xf32> -> vector<8x200xf32>
    %c0_29 = arith.constant 0 : index
    %c0_30 = arith.constant 0 : index
    %53 = vector.load %arg9[%c0_29, %c0_30] : memref<1x200xf32, #tpu.memory_space<vmem>>, vector<1x200xf32>
    %54 = vector.broadcast %53 : vector<1x200xf32> to vector<8x200xf32>
    %55 = arith.addf %52, %54 : vector<8x200xf32>
    %56 = math.tanh %55 : vector<8x200xf32>
    %57 = arith.truncf %56 : vector<8x200xf32> to vector<8x200xbf16>
    %c0_31 = arith.constant 0 : index
    %c0_32 = arith.constant 0 : index
    %58 = vector.load %arg10[%c0_31, %c0_32] : memref<200x12xbf16, #tpu.memory_space<vmem>>, vector<200x12xbf16>
    %cst_33 = arith.constant dense<0.000000e+00> : vector<8x12xf32>
    %59 = tpu.matmul %57, %58, %cst_33 {dimension_numbers = #tpu.dot_dimension_numbers<[1], [0], [0], [1], [0, 0, 1, 1], [], []>} : vector<8x200xbf16>, vector<200x12xbf16>, vector<8x12xf32> -> vector<8x12xf32>
    %c0_34 = arith.constant 0 : index
    %c0_35 = arith.constant 0 : index
    %60 = vector.load %arg11[%c0_34, %c0_35] : memref<1x12xf32, #tpu.memory_space<vmem>>, vector<1x12xf32>
    %61 = vector.broadcast %60 : vector<1x12xf32> to vector<8x12xf32>
    %62 = arith.addf %59, %61 : vector<8x12xf32>
    %c0_36 = arith.constant 0 : index
    %c0_37 = arith.constant 0 : index
    %63 = vector.load %arg3[%c0_36, %c0_37] : memref<8x2xf32, #tpu.memory_space<vmem>>, vector<8x2xf32>
    %64 = vector.extract_strided_slice %49 {offsets = [0, 2], sizes = [8, 12], strides = [1, 1]} : vector<8x30xf32> to vector<8x12xf32>
    %65 = arith.mulf %64, %62 : vector<8x12xf32>
    %cst_38 = arith.constant dense<0.000000e+00> : vector<8xf32>
    %66 = vector.multi_reduction <add>, %65, %cst_38 [1] : vector<8x12xf32> to vector<8xf32>
    %67 = vector.shape_cast %66 : vector<8xf32> to vector<8x1xf32>
    %68 = vector.extract_strided_slice %49 {offsets = [0, 14], sizes = [8, 2], strides = [1, 1]} : vector<8x30xf32> to vector<8x2xf32>
    %69 = arith.mulf %68, %63 : vector<8x2xf32>
    %cst_39 = arith.constant dense<0.000000e+00> : vector<8xf32>
    %70 = vector.multi_reduction <add>, %69, %cst_39 [1] : vector<8x2xf32> to vector<8xf32>
    %71 = vector.shape_cast %70 : vector<8xf32> to vector<8x1xf32>
    %72 = arith.addf %67, %71 : vector<8x1xf32>
    %73 = vector.extract_strided_slice %49 {offsets = [0, 16], sizes = [8, 12], strides = [1, 1]} : vector<8x30xf32> to vector<8x12xf32>
    %74 = arith.mulf %73, %62 : vector<8x12xf32>
    %cst_40 = arith.constant dense<0.000000e+00> : vector<8xf32>
    %75 = vector.multi_reduction <add>, %74, %cst_40 [1] : vector<8x12xf32> to vector<8xf32>
    %76 = vector.shape_cast %75 : vector<8xf32> to vector<8x1xf32>
    %77 = vector.extract_strided_slice %49 {offsets = [0, 28], sizes = [8, 2], strides = [1, 1]} : vector<8x30xf32> to vector<8x2xf32>
    %78 = arith.mulf %77, %63 : vector<8x2xf32>
    %cst_41 = arith.constant dense<0.000000e+00> : vector<8xf32>
    %79 = vector.multi_reduction <add>, %78, %cst_41 [1] : vector<8x2xf32> to vector<8xf32>
    %80 = vector.shape_cast %79 : vector<8xf32> to vector<8x1xf32>
    %81 = arith.addf %76, %80 : vector<8x1xf32>
    %82 = tpu.concatenate %72, %81 in 1 : vector<8x1xf32>, vector<8x1xf32> -> vector<8x2xf32>
    %83 = vector.extract_strided_slice %49 {offsets = [0, 0], sizes = [8, 2], strides = [1, 1]} : vector<8x30xf32> to vector<8x2xf32>
    %84 = arith.addf %82, %83 : vector<8x2xf32>
    %c0_42 = arith.constant 0 : index
    %c0_43 = arith.constant 0 : index
    %85 = vector.load %arg12[%c0_42, %c0_43] : memref<8x2xf32, #tpu.memory_space<vmem>>, vector<8x2xf32>
    tpu.vector_store %arg12[%c0_42, %c0_43], %84 {strides = array<i32>} : memref<8x2xf32, #tpu.memory_space<vmem>>, vector<8x2xf32>,
    return
  }
  func.func @transform_0(%arg0: i32) -> (i32, i32) {
    %c0_i32 = arith.constant 0 : i32
    %c0_i32_0 = arith.constant 0 : i32
    return %arg0, %c0_i32 : i32, i32
  }
  func.func @transform_1(%arg0: i32) -> (i32, i32) {
    %c0_i32 = arith.constant 0 : i32
    %c0_i32_0 = arith.constant 0 : i32
    return %arg0, %c0_i32 : i32, i32
  }
  func.func @transform_2(%arg0: i32) -> (i32, i32) {
    %c0_i32 = arith.constant 0 : i32
    %c0_i32_0 = arith.constant 0 : i32
    return %arg0, %c0_i32 : i32, i32
  }
  func.func @transform_3(%arg0: i32) -> (i32, i32) {
    %c0_i32 = arith.constant 0 : i32
    %c0_i32_0 = arith.constant 0 : i32
    %c0_i32_1 = arith.constant 0 : i32
    return %c0_i32, %c0_i32_0 : i32, i32
  }
  func.func @transform_4(%arg0: i32) -> (i32, i32) {
    %c0_i32 = arith.constant 0 : i32
    %c0_i32_0 = arith.constant 0 : i32
    %c0_i32_1 = arith.constant 0 : i32
    return %c0_i32, %c0_i32_0 : i32, i32
  }
  func.func @transform_5(%arg0: i32) -> (i32, i32) {
    %c0_i32 = arith.constant 0 : i32
    %c0_i32_0 = arith.constant 0 : i32
    %c0_i32_1 = arith.constant 0 : i32
    return %c0_i32, %c0_i32_0 : i32, i32
  }
  func.func @transform_6(%arg0: i32) -> (i32, i32) {
    %c0_i32 = arith.constant 0 : i32
    %c0_i32_0 = arith.constant 0 : i32
    %c0_i32_1 = arith.constant 0 : i32
    return %c0_i32, %c0_i32_0 : i32, i32
  }
  func.func @transform_7(%arg0: i32) -> (i32, i32) {
    %c0_i32 = arith.constant 0 : i32
    %c0_i32_0 = arith.constant 0 : i32
    %c0_i32_1 = arith.constant 0 : i32
    return %c0_i32, %c0_i32_0 : i32, i32
  }
  func.func @transform_8(%arg0: i32) -> (i32, i32) {
    %c0_i32 = arith.constant 0 : i32
    %c0_i32_0 = arith.constant 0 : i32
    %c0_i32_1 = arith.constant 0 : i32
    return %c0_i32, %c0_i32_0 : i32, i32
  }
  func.func @transform_9(%arg0: i32) -> (i32, i32) {
    %c0_i32 = arith.constant 0 : i32
    %c0_i32_0 = arith.constant 0 : i32
    %c0_i32_1 = arith.constant 0 : i32
    return %c0_i32, %c0_i32_0 : i32, i32
  }
  func.func @transform_10(%arg0: i32) -> (i32, i32) {
    %c0_i32 = arith.constant 0 : i32
    %c0_i32_0 = arith.constant 0 : i32
    %c0_i32_1 = arith.constant 0 : i32
    return %c0_i32, %c0_i32_0 : i32, i32
  }
  func.func @transform_11(%arg0: i32) -> (i32, i32) {
    %c0_i32 = arith.constant 0 : i32
    %c0_i32_0 = arith.constant 0 : i32
    return %arg0, %c0_i32 : i32, i32
  }
}

</mosaic_0001>

<llo_original>
// kernel: tpu_custom_call.1
$region0: #{tpu_custom_call.1}
  #allocation0 [shape = 'u32[]', space=smem, size = 0x4, offset = 0x4, fixed_abs, tag = 'smem constant byte address 0x4 - core index']
  #allocation1 [shape = 'u32[144,128]{1,0:T(1,128)}', space=vmem, size = 0x12000, scoped, tag = 'internal scratch']
  %s0 = inlined_call_operand.vmem [shape: f32[8,4], index: 0, kind: input, shape index: {}]
  %s1 = inlined_call_operand.vmem [shape: bf16[8,100], index: 1, kind: input, shape index: {}]
  %s2 = inlined_call_operand.vmem [shape: f32[8,2], index: 2, kind: input, shape index: {}]
  %s3 = inlined_call_operand.vmem [shape: f32[4,64], index: 3, kind: input, shape index: {}]
  %s4 = inlined_call_operand.vmem [shape: f32[1,64], index: 4, kind: input, shape index: {}]
  %s5 = inlined_call_operand.vmem [shape: f32[64,30], index: 5, kind: input, shape index: {}]
  %s6 = inlined_call_operand.vmem [shape: f32[1,30], index: 6, kind: input, shape index: {}]
  %s7 = inlined_call_operand.vmem [shape: bf16[100,200], index: 7, kind: input, shape index: {}]
  %s8 = inlined_call_operand.vmem [shape: f32[1,200], index: 8, kind: input, shape index: {}]
  %s9 = inlined_call_operand.vmem [shape: bf16[200,12], index: 9, kind: input, shape index: {}]
  %s10 = inlined_call_operand.vmem [shape: f32[1,12], index: 10, kind: input, shape index: {}]
  %s11 = inlined_call_operand.vmem [shape: f32[8,2], index: 11, kind: output, shape index: {}]
  %s12 = sld [smem:[#allocation0]]
  $region54: #{tpu_custom_call.1} parent=0
    _
  %s14 = ssub.s32 1, %s12
  %s15 = scalar_select 0, %s14, %s12
  // Predicated region
  $region2: #{tpu_custom_call.1} parent=0 // pred_check
    _
  $region3: #{tpu_custom_call.1} parent=0 // pred_check_branch
    %17 = sbr.rel (0) target = $region5
  $region4: #{tpu_custom_call.1} parent=0 // pred_region
    _
  $region5: #{tpu_custom_call.1} parent=0 // pred_fallthru
    _
  // Predicated region
  $region6: #{tpu_custom_call.1} parent=0 // pred_check
    _
  $region7: #{tpu_custom_call.1} parent=0 // pred_check_branch
    %19 = sbr.rel (0) target = $region9
  $region8: #{tpu_custom_call.1} parent=0 // pred_region
    _
  $region9: #{tpu_custom_call.1} parent=0 // pred_fallthru
    _
  // Predicated region
  $region10: #{tpu_custom_call.1} parent=0 // pred_check
    _
  $region11: #{tpu_custom_call.1} parent=0 // pred_check_branch
    %21 = sbr.rel (0) target = $region13
  $region12: #{tpu_custom_call.1} parent=0 // pred_region
    _
  $region13: #{tpu_custom_call.1} parent=0 // pred_fallthru
    _
  // Predicated region
  $region14: #{tpu_custom_call.1} parent=0 // pred_check
    _
  $region15: #{tpu_custom_call.1} parent=0 // pred_check_branch
    %23 = sbr.rel (0) target = $region17
  $region16: #{tpu_custom_call.1} parent=0 // pred_region
    _
  $region17: #{tpu_custom_call.1} parent=0 // pred_fallthru
    _
  // Predicated region
  $region18: #{tpu_custom_call.1} parent=0 // pred_check
    _
  $region19: #{tpu_custom_call.1} parent=0 // pred_check_branch
    %25 = sbr.rel (0) target = $region21
  $region20: #{tpu_custom_call.1} parent=0 // pred_region
    _
  $region21: #{tpu_custom_call.1} parent=0 // pred_fallthru
    _
  // Predicated region
  $region22: #{tpu_custom_call.1} parent=0 // pred_check
    _
  $region23: #{tpu_custom_call.1} parent=0 // pred_check_branch
    %27 = sbr.rel (0) target = $region25
  $region24: #{tpu_custom_call.1} parent=0 // pred_region
    _
  $region25: #{tpu_custom_call.1} parent=0 // pred_fallthru
    _
  // Predicated region
  $region26: #{tpu_custom_call.1} parent=0 // pred_check
    _
  $region27: #{tpu_custom_call.1} parent=0 // pred_check_branch
    %29 = sbr.rel (0) target = $region29
  $region28: #{tpu_custom_call.1} parent=0 // pred_region
    _
  $region29: #{tpu_custom_call.1} parent=0 // pred_fallthru
    _
  // Predicated region
  $region30: #{tpu_custom_call.1} parent=0 // pred_check
    _
  $region31: #{tpu_custom_call.1} parent=0 // pred_check_branch
    %31 = sbr.rel (0) target = $region33
  $region32: #{tpu_custom_call.1} parent=0 // pred_region
    _
  $region33: #{tpu_custom_call.1} parent=0 // pred_fallthru
    _
  // Predicated region
  $region34: #{tpu_custom_call.1} parent=0 // pred_check
    _
  $region35: #{tpu_custom_call.1} parent=0 // pred_check_branch
    %33 = sbr.rel (0) target = $region37
  $region36: #{tpu_custom_call.1} parent=0 // pred_region
    _
  $region37: #{tpu_custom_call.1} parent=0 // pred_fallthru
    _
  // Predicated region
  $region38: #{tpu_custom_call.1} parent=0 // pred_check
    _
  $region39: #{tpu_custom_call.1} parent=0 // pred_check_branch
    %35 = sbr.rel (0) target = $region41
  $region40: #{tpu_custom_call.1} parent=0 // pred_region
    _
  $region41: #{tpu_custom_call.1} parent=0 // pred_fallthru
    _
  // Predicated region
  $region42: #{tpu_custom_call.1} parent=0 // pred_check
    _
  $region43: #{tpu_custom_call.1} parent=0 // pred_check_branch
    %37 = sbr.rel (0) target = $region45
  $region44: #{tpu_custom_call.1} parent=0 // pred_region
    _
  $region45: #{tpu_custom_call.1} parent=0 // pred_fallthru
    _
  %v39 = vld [vmem:[%s0] sm:$0xff]
  %v40 = vld [vmem:[%s3] sm:$0xf]
  %v41 = vld [vmem:[%s4] sm:$0x1]
  %v43 = vlaneseq
  %v44 = vshrl.u32 %v43, 7
  %v45 = vsub.s32 0, %v44
  %v46 = vrot.slane %v41, %v45
  %vm48 = vcmask 31744
  %v50 = vsel %vm48, %v39, 0
  %vm52 = vcmask 1043456
  %v54 = vsel %vm52, %v40, 0
  %56 = vmatprep.subr.mxu0 0.0
  %57 = vmatpush1.msra.mxu0 %v54
  %58 = vmatprep.subr.mxu0 0.0
  %59 = vmatpush1.msra.mxu0 0.0
  %60 = vmatprep.subr.mxu0 0.0
  %61 = vmatpush1.msra.mxu0 0.0
  %62 = vmatprep.subr.mxu0 0.0
  %63 = vmatpush1.msra.mxu0 0.0
  %64 = vmatprep.subr.mxu0 0.0
  %65 = vmatpush1.msra.mxu0 0.0
  %66 = vmatprep.subr.mxu0 0.0
  %67 = vmatpush1.msra.mxu0 0.0
  %68 = vmatprep.subr.mxu0 0.0
  %69 = vmatpush1.msra.mxu0 0.0
  %70 = vmatprep.subr.mxu0 0.0
  %71 = vmatpush1.msra.mxu0 0.0
  %72 = vmatprep.subr.mxu0 0.0
  %73 = vmatpush1.msra.mxu0 0.0
  %74 = vmatprep.subr.mxu0 0.0
  %75 = vmatpush1.msra.mxu0 0.0
  %76 = vmatprep.subr.mxu0 0.0
  %77 = vmatpush1.msra.mxu0 0.0
  %78 = vmatprep.subr.mxu0 0.0
  %79 = vmatpush1.msra.mxu0 0.0
  %80 = vmatprep.subr.mxu0 0.0
  %81 = vmatpush1.msra.mxu0 0.0
  %82 = vmatprep.subr.mxu0 0.0
  %83 = vmatpush1.msra.mxu0 0.0
  %84 = vmatprep.subr.mxu0 0.0
  %85 = vmatpush1.msra.mxu0 0.0
  %86 = vmatprep.subr.mxu0 0.0
  %87 = vmatpush1.msra.mxu0 0.0
  %88 = vmatprep.subr.mxu0 0.0
  %89 = vmatpush1.msra.mxu0 0.0
  %90 = vmatprep.subr.mxu0 0.0
  %91 = vmatpush1.msra.mxu0 0.0
  %92 = vmatprep.subr.mxu0 0.0
  %93 = vmatpush1.msra.mxu0 0.0
  %94 = vmatprep.subr.mxu0 0.0
  %95 = vmatpush1.msra.mxu0 0.0
  %96 = vmatprep.subr.mxu0 0.0
  %97 = vmatpush1.msra.mxu0 0.0
  %98 = vmatprep.subr.mxu0 0.0
  %99 = vmatpush1.msra.mxu0 0.0
  %100 = vmatprep.subr.mxu0 0.0
  %101 = vmatpush1.msra.mxu0 0.0
  %102 = vmatprep.subr.mxu0 0.0
  %103 = vmatpush1.msra.mxu0 0.0
  %104 = vmatprep.subr.mxu0 0.0
  %105 = vmatpush1.msra.mxu0 0.0
  %106 = vmatprep.subr.mxu0 0.0
  %107 = vmatpush1.msra.mxu0 0.0
  %108 = vmatprep.subr.mxu0 0.0
  %109 = vmatpush1.msra.mxu0 0.0
  %110 = vmatprep.subr.mxu0 0.0
  %111 = vmatpush1.msra.mxu0 0.0
  %112 = vmatprep.subr.mxu0 0.0
  %113 = vmatpush1.msra.mxu0 0.0
  %114 = vmatprep.subr.mxu0 0.0
  %115 = vmatpush1.msra.mxu0 0.0
  %116 = vmatprep.subr.mxu0 0.0
  %117 = vmatpush1.msra.mxu0 0.0
  %118 = vmatprep.subr.mxu0 0.0
  %119 = vmatpush1.msra.mxu0 0.0
  %120 = vmatprep.mubr.f32.mxu0 0.0
  %121 = vmatmul.mubr.f32.gmra.mrb[0].mxu0 %v50
  %v122 = vpop.f32.mrb[0].mxu0
  %v123 = vadd.f32 %v46, %v122
  %v124 = vpop.f32.mrb[0].mxu0
  %125 = vdwg.mxu0
  %v126 = vmul.f32 %v123, 0.5
  %v127 = vmul.f32 %v123, 0.70710677
  %v128 = vand.u32 2147483647, %v127
  %v129 = vmul.f32 %v128, 0.3275911
  %v130 = vadd.f32 %v129, 1.0
  %v131 = vrcp.pop %v130
  %v132 = vmul.f32 %v131, 1.0614054
  %v133 = vadd.f32 %v132, -1.4531521
  %v134 = vmul.f32 %v133, %v131
  %v135 = vadd.f32 %v134, 1.4214138
  %v136 = vmul.f32 %v135, %v131
  %v137 = vadd.f32 %v136, -0.28449672
  %v138 = vmul.f32 %v137, %v131
  %v139 = vadd.f32 %v138, 0.2548296
  %v140 = vmul.f32 %v139, %v131
  %v141 = vsub.f32 0.0, %v128
  %v142 = vmul.f32 %v141, %v128
  %v143 = vmul.f32 %v142, 1.442695
  %v144 = vpow.pop %v143
  %v145 = vmul.f32 %v140, %v144
  %v146 = vsub.f32 1.0, %v145
  %vm147 = vcmp.ge.f32.partialorder %v127, 0.0
  %v148 = vsub.f32 0.0, %v146
  %v149 = vsel %vm147, %v146, %v148
  %v150 = vadd.f32 %v149, 1.0
  %v151 = vmul.f32 %v126, %v150
  %v152 = vld [vmem:[%s5] sm:$0xff]
  %v153 = vld [vmem:[%s5 + $0x8] sm:$0xff]
  %v154 = vld [vmem:[%s5 + $0x10] sm:$0xff]
  %v155 = vld [vmem:[%s5 + $0x18] sm:$0xff]
  %v156 = vld [vmem:[%s5 + $0x20] sm:$0xff]
  %v157 = vld [vmem:[%s5 + $0x28] sm:$0xff]
  %v158 = vld [vmem:[%s5 + $0x30] sm:$0xff]
  %v159 = vld [vmem:[%s5 + $0x38] sm:$0xff]
  %v160 = vld [vmem:[%s6] sm:$0x1]
  %v162 = vlaneseq
  %v163 = vshrl.u32 %v162, 7
  %v164 = vsub.s32 0, %v163
  %v165 = vrot.slane %v160, %v164
  %vm167 = vcmask 523264
  %v169 = vsel %vm167, %v151, 0
  %171 = vmatprep.subr.mxu0 0.0
  %172 = vmatpush1.msra.mxu0 %v152
  %173 = vmatprep.subr.mxu0 0.0
  %174 = vmatpush1.msra.mxu0 %v153
  %175 = vmatprep.subr.mxu0 0.0
  %176 = vmatpush1.msra.mxu0 %v154
  %177 = vmatprep.subr.mxu0 0.0
  %178 = vmatpush1.msra.mxu0 %v155
  %179 = vmatprep.subr.mxu0 0.0
  %180 = vmatpush1.msra.mxu0 %v156
  %181 = vmatprep.subr.mxu0 0.0
  %182 = vmatpush1.msra.mxu0 %v157
  %183 = vmatprep.subr.mxu0 0.0
  %184 = vmatpush1.msra.mxu0 %v158
  %185 = vmatprep.subr.mxu0 0.0
  %186 = vmatpush1.msra.mxu0 %v159
  %187 = vmatprep.subr.mxu0 0.0
  %188 = vmatpush1.msra.mxu0 0.0
  %189 = vmatprep.subr.mxu0 0.0
  %190 = vmatpush1.msra.mxu0 0.0
  %191 = vmatprep.subr.mxu0 0.0
  %192 = vmatpush1.msra.mxu0 0.0
  %193 = vmatprep.subr.mxu0 0.0
  %194 = vmatpush1.msra.mxu0 0.0
  %195 = vmatprep.subr.mxu0 0.0
  %196 = vmatpush1.msra.mxu0 0.0
  %197 = vmatprep.subr.mxu0 0.0
  %198 = vmatpush1.msra.mxu0 0.0
  %199 = vmatprep.subr.mxu0 0.0
  %200 = vmatpush1.msra.mxu0 0.0
  %201 = vmatprep.subr.mxu0 0.0
  %202 = vmatpush1.msra.mxu0 0.0
  %203 = vmatprep.subr.mxu0 0.0
  %204 = vmatpush1.msra.mxu0 0.0
  %205 = vmatprep.subr.mxu0 0.0
  %206 = vmatpush1.msra.mxu0 0.0
  %207 = vmatprep.subr.mxu0 0.0
  %208 = vmatpush1.msra.mxu0 0.0
  %209 = vmatprep.subr.mxu0 0.0
  %210 = vmatpush1.msra.mxu0 0.0
  %211 = vmatprep.subr.mxu0 0.0
  %212 = vmatpush1.msra.mxu0 0.0
  %213 = vmatprep.subr.mxu0 0.0
  %214 = vmatpush1.msra.mxu0 0.0
  %215 = vmatprep.subr.mxu0 0.0
  %216 = vmatpush1.msra.mxu0 0.0
  %217 = vmatprep.subr.mxu0 0.0
  %218 = vmatpush1.msra.mxu0 0.0
  %219 = vmatprep.subr.mxu0 0.0
  %220 = vmatpush1.msra.mxu0 0.0
  %221 = vmatprep.subr.mxu0 0.0
  %222 = vmatpush1.msra.mxu0 0.0
  %223 = vmatprep.subr.mxu0 0.0
  %224 = vmatpush1.msra.mxu0 0.0
  %225 = vmatprep.subr.mxu0 0.0
  %226 = vmatpush1.msra.mxu0 0.0
  %227 = vmatprep.subr.mxu0 0.0
  %228 = vmatpush1.msra.mxu0 0.0
  %229 = vmatprep.subr.mxu0 0.0
  %230 = vmatpush1.msra.mxu0 0.0
  %231 = vmatprep.subr.mxu0 0.0
  %232 = vmatpush1.msra.mxu0 0.0
  %233 = vmatprep.subr.mxu0 0.0
  %234 = vmatpush1.msra.mxu0 0.0
  %235 = vmatprep.mubr.f32.mxu0 0.0
  %236 = vmatmul.mubr.f32.gmra.mrb[0].mxu0 %v169
  %v237 = vpop.f32.mrb[0].mxu0
  %v238 = vadd.f32 %v165, %v237
  %v239 = vpop.f32.mrb[0].mxu0
  %240 = vdwg.mxu0
  %v241 = vld [vmem:[%s1] sm:$0xf]
  %v242 = vld [vmem:[%s7] sm:$0xff]
  %v243 = vld [vmem:[%s7 + $0x8] sm:$0xff]
  %v244 = vld [vmem:[%s7 + $0x10] sm:$0xff]
  %v245 = vld [vmem:[%s7 + $0x18] sm:$0xff]
  %v246 = vld [vmem:[%s7 + $0x20] sm:$0xff]
  %v247 = vld [vmem:[%s7 + $0x28] sm:$0xff]
  %v248 = vld [vmem:[%s7 + $0x30] sm:$0xff]
  %v249 = vld [vmem:[%s7 + $0x38] sm:$0xff]
  %v250 = vld [vmem:[%s7 + $0x40] sm:$0xff]
  %v251 = vld [vmem:[%s7 + $0x48] sm:$0xff]
  %v252 = vld [vmem:[%s7 + $0x50] sm:$0xff]
  %v253 = vld [vmem:[%s7 + $0x58] sm:$0xff]
  %v254 = vld [vmem:[%s7 + $0x60] sm:$0x33]
  %v255 = vld [vmem:[%s8] sm:$0x3]
  %v257 = vlaneseq
  %v258 = vshrl.u32 %v257, 7
  %v259 = vsub.s32 0, %v258
  %v260 = vrot.slane %v255, %v259
  %v261 = vlaneseq
  %v262 = vshrl.u32 %v261, 7
  %v263 = vsub.s32 1, %v262
  %v264 = vrot.slane %v255, %v263
  %v280 = vunpack.c.l.b16 %v242
  %v281 = vunpack.c.h.b16 %v242
  %v282 = vunpack.c.l.b16 %v243
  %v283 = vunpack.c.h.b16 %v243
  %v284 = vunpack.c.l.b16 %v244
  %v285 = vunpack.c.h.b16 %v244
  %v286 = vunpack.c.l.b16 %v245
  %v287 = vunpack.c.h.b16 %v245
  %v288 = vunpack.c.l.b16 %v246
  %v289 = vunpack.c.h.b16 %v246
  %v290 = vunpack.c.l.b16 %v247
  %v291 = vunpack.c.h.b16 %v247
  %v292 = vunpack.c.l.b16 %v248
  %v293 = vunpack.c.h.b16 %v248
  %v294 = vunpack.c.l.b16 %v249
  %v295 = vunpack.c.h.b16 %v249
  %v296 = vunpack.c.l.b16 %v250
  %v297 = vunpack.c.h.b16 %v250
  %v298 = vunpack.c.l.b16 %v251
  %v299 = vunpack.c.h.b16 %v251
  %v300 = vunpack.c.l.b16 %v252
  %v301 = vunpack.c.h.b16 %v252
  %v302 = vunpack.c.l.b16 %v253
  %v303 = vunpack.c.h.b16 %v253
  %v304 = vunpack.c.l.b16 %v254
  %v305 = vunpack.c.h.b16 %v254
  %v306 = vpack.c.b16 %v282, %v280
  %v307 = vpack.c.b16 %v283, %v281
  %v308 = vpack.c.b16 %v286, %v284
  %v309 = vpack.c.b16 %v287, %v285
  %v310 = vpack.c.b16 %v290, %v288
  %v311 = vpack.c.b16 %v291, %v289
  %v312 = vpack.c.b16 %v294, %v292
  %v313 = vpack.c.b16 %v295, %v293
  %v314 = vpack.c.b16 %v298, %v296
  %v315 = vpack.c.b16 %v299, %v297
  %v316 = vpack.c.b16 %v302, %v300
  %v317 = vpack.c.b16 %v303, %v301
  %v318 = vpack.c.b16 %v304, %v304
  %v319 = vpack.c.b16 %v305, %v305
  %vm332 = vcmask 818176
  %v334 = vsel %vm332, %v241, 0
  %vm336 = vcmask 1041408
  %v338 = vsel %vm336, %v318, 0
  %v341 = vsel %vm336, %v319, 0
  %343 = vmatprep.subr.bf16.mxu0 %v307
  %344 = vmatpush1.bf16.msra.mxu0 %v306
  %345 = vmatprep.subr.bf16.mxu0 %v309
  %346 = vmatpush1.bf16.msra.mxu0 %v308
  %347 = vmatprep.subr.bf16.mxu0 %v311
  %348 = vmatpush1.bf16.msra.mxu0 %v310
  %349 = vmatprep.subr.bf16.mxu0 %v313
  %350 = vmatpush1.bf16.msra.mxu0 %v312
  %351 = vmatprep.subr.bf16.mxu0 %v315
  %352 = vmatpush1.bf16.msra.mxu0 %v314
  %353 = vmatprep.subr.bf16.mxu0 %v317
  %354 = vmatpush1.bf16.msra.mxu0 %v316
  %355 = vmatprep.subr.bf16.mxu0 %v341
  %356 = vmatpush1.bf16.msra.mxu0 %v338
  %357 = vmatprep.subr.bf16.mxu0 0
  %358 = vmatpush1.bf16.msra.mxu0 0
  %359 = vmatprep.subr.bf16.mxu0 0
  %360 = vmatpush1.bf16.msra.mxu0 0
  %361 = vmatprep.subr.bf16.mxu0 0
  %362 = vmatpush1.bf16.msra.mxu0 0
  %363 = vmatprep.subr.bf16.mxu0 0
  %364 = vmatpush1.bf16.msra.mxu0 0
  %365 = vmatprep.subr.bf16.mxu0 0
  %366 = vmatpush1.bf16.msra.mxu0 0
  %367 = vmatprep.subr.bf16.mxu0 0
  %368 = vmatpush1.bf16.msra.mxu0 0
  %369 = vmatprep.subr.bf16.mxu0 0
  %370 = vmatpush1.bf16.msra.mxu0 0
  %371 = vmatprep.subr.bf16.mxu0 0
  %372 = vmatpush1.bf16.msra.mxu0 0
  %373 = vmatprep.subr.bf16.mxu0 0
  %374 = vmatpush1.bf16.msra.mxu0 0
  %375 = vmatprep.mubr.bf16.mxu0 0
  %376 = vmatmul.mubr.bf16.gmra.mrb[0].mxu0 %v334
  %v377 = vpop.f32.mrb[0].mxu0
  %v378 = vadd.f32 %v260, %v377
  %v379 = vpop.f32.mrb[0].mxu0
  %v380 = vadd.f32 %v264, %v379
  %v381 = vpop.f32.mrb[0].mxu0
  %v382 = vpop.f32.mrb[0].mxu0
  %383 = vdwg.mxu0
  %v384 = vtanh.pop %v378
  %v385 = vtanh.pop %v380
  %v386 = vpack.c.bf16 %v384, %v384
  %v387 = vpack.c.bf16 %v385, %v385
  %v388 = vld [vmem:[%s9] sm:$0xf]
  %v389 = vld [vmem:[%s9 + $0x4] sm:$0xf]
  %v390 = vld [vmem:[%s9 + $0x8] sm:$0xf]
  %v391 = vld [vmem:[%s9 + $0xc] sm:$0xf]
  %v392 = vld [vmem:[%s9 + $0x10] sm:$0xf]
  %v393 = vld [vmem:[%s9 + $0x14] sm:$0xf]
  %v394 = vld [vmem:[%s9 + $0x18] sm:$0xf]
  %v395 = vld [vmem:[%s9 + $0x1c] sm:$0xf]
  %v396 = vld [vmem:[%s9 + $0x20] sm:$0xf]
  %v397 = vld [vmem:[%s9 + $0x24] sm:$0xf]
  %v398 = vld [vmem:[%s9 + $0x28] sm:$0xf]
  %v399 = vld [vmem:[%s9 + $0x2c] sm:$0xf]
  %v400 = vld [vmem:[%s9 + $0x30] sm:$0xf]
  %v401 = vld [vmem:[%s9 + $0x34] sm:$0xf]
  %v402 = vld [vmem:[%s9 + $0x38] sm:$0xf]
  %v403 = vld [vmem:[%s9 + $0x3c] sm:$0xf]
  %v404 = vld [vmem:[%s9 + $0x40] sm:$0xf]
  %v405 = vld [vmem:[%s9 + $0x44] sm:$0xf]
  %v406 = vld [vmem:[%s9 + $0x48] sm:$0xf]
  %v407 = vld [vmem:[%s9 + $0x4c] sm:$0xf]
  %v408 = vld [vmem:[%s9 + $0x50] sm:$0xf]
  %v409 = vld [vmem:[%s9 + $0x54] sm:$0xf]
  %v410 = vld [vmem:[%s9 + $0x58] sm:$0xf]
  %v411 = vld [vmem:[%s9 + $0x5c] sm:$0xf]
  %v412 = vld [vmem:[%s9 + $0x60] sm:$0xf]
  %v413 = vld [vmem:[%s10] sm:$0x1]
  %v415 = vlaneseq
  %v416 = vshrl.u32 %v415, 7
  %v417 = vsub.s32 0, %v416
  %v418 = vrot.slane %v413, %v417
  %v445 = vunpack.c.l.b16 %v388
  %v446 = vunpack.c.l.b16 %v389
  %v447 = vunpack.c.l.b16 %v390
  %v448 = vunpack.c.l.b16 %v391
  %v449 = vunpack.c.l.b16 %v392
  %v450 = vunpack.c.l.b16 %v393
  %v451 = vunpack.c.l.b16 %v394
  %v452 = vunpack.c.l.b16 %v395
  %v453 = vunpack.c.l.b16 %v396
  %v454 = vunpack.c.l.b16 %v397
  %v455 = vunpack.c.l.b16 %v398
  %v456 = vunpack.c.l.b16 %v399
  %v457 = vunpack.c.l.b16 %v400
  %v458 = vunpack.c.l.b16 %v401
  %v459 = vunpack.c.l.b16 %v402
  %v460 = vunpack.c.l.b16 %v403
  %v461 = vunpack.c.l.b16 %v404
  %v462 = vunpack.c.l.b16 %v405
  %v463 = vunpack.c.l.b16 %v406
  %v464 = vunpack.c.l.b16 %v407
  %v465 = vunpack.c.l.b16 %v408
  %v466 = vunpack.c.l.b16 %v409
  %v467 = vunpack.c.l.b16 %v410
  %v468 = vunpack.c.l.b16 %v411
  %v469 = vunpack.c.l.b16 %v412
  %v470 = vpack.c.b16 %v446, %v445
  %v471 = vpack.c.b16 %v448, %v447
  %v472 = vpack.c.b16 %v450, %v449
  %v473 = vpack.c.b16 %v452, %v451
  %v474 = vpack.c.b16 %v454, %v453
  %v475 = vpack.c.b16 %v456, %v455
  %v476 = vpack.c.b16 %v458, %v457
  %v477 = vpack.c.b16 %v460, %v459
  %v478 = vpack.c.b16 %v462, %v461
  %v479 = vpack.c.b16 %v464, %v463
  %v480 = vpack.c.b16 %v466, %v465
  %v481 = vpack.c.b16 %v468, %v467
  %v482 = vpack.c.b16 %v469, %v469
  %vm495 = vcmask 588800
  %v497 = vsel %vm495, %v387, 0
  %v500 = vsel %vm52, %v482, 0
  %502 = vmatprep.subr.bf16.mxu0 0
  %503 = vmatpush1.bf16.msra.mxu0 %v470
  %504 = vmatprep.subr.bf16.mxu0 0
  %505 = vmatpush1.bf16.msra.mxu0 %v471
  %506 = vmatprep.subr.bf16.mxu0 0
  %507 = vmatpush1.bf16.msra.mxu0 %v472
  %508 = vmatprep.subr.bf16.mxu0 0
  %509 = vmatpush1.bf16.msra.mxu0 %v473
  %510 = vmatprep.subr.bf16.mxu0 0
  %511 = vmatpush1.bf16.msra.mxu0 %v474
  %512 = vmatprep.subr.bf16.mxu0 0
  %513 = vmatpush1.bf16.msra.mxu0 %v475
  %514 = vmatprep.subr.bf16.mxu0 0
  %515 = vmatpush1.bf16.msra.mxu0 %v476
  %516 = vmatprep.subr.bf16.mxu0 0
  %517 = vmatpush1.bf16.msra.mxu0 %v477
  %518 = vmatprep.subr.bf16.mxu0 0
  %519 = vmatpush1.bf16.msra.mxu0 %v478
  %520 = vmatprep.subr.bf16.mxu0 0
  %521 = vmatpush1.bf16.msra.mxu0 %v479
  %522 = vmatprep.subr.bf16.mxu0 0
  %523 = vmatpush1.bf16.msra.mxu0 %v480
  %524 = vmatprep.subr.bf16.mxu0 0
  %525 = vmatpush1.bf16.msra.mxu0 %v481
  %526 = vmatprep.subr.bf16.mxu0 0
  %527 = vmatpush1.bf16.msra.mxu0 %v500
  %528 = vmatprep.subr.bf16.mxu0 0
  %529 = vmatpush1.bf16.msra.mxu0 0
  %530 = vmatprep.subr.bf16.mxu0 0
  %531 = vmatpush1.bf16.msra.mxu0 0
  %532 = vmatprep.subr.bf16.mxu0 0
  %533 = vmatpush1.bf16.msra.mxu0 0
  %534 = vmatprep.mubr.bf16.mxu0 %v497
  %535 = vmatmul.mubr.bf16.gmra.mrb[0].mxu0 %v386
  %v536 = vpop.f32.mrb[0].mxu0
  %v537 = vadd.f32 %v418, %v536
  %v538 = vpop.f32.mrb[0].mxu0
  %v539 = vpop.f32.mrb[0].mxu0
  %v540 = vpop.f32.mrb[0].mxu0
  %541 = vdwg.mxu0
  %v542 = vld [vmem:[%s2] sm:$0xff]
  %544 = vrot.lane.b32.xlu0 %v537, 2
  %v545 = vpop.permute.xlu0 %544
  %v547 = vmul.f32 %v238, %v545
  %549 = vrot.lane.b32.xlu0 %v547, 126
  %v550 = vpop.permute.xlu0 %549
  %vm552 = vcmask 97280
  %v553 = vsel %vm552, %v550, 0.0
  %554 = vadd.xlane.f32.xlu0 %v553
  %v555 = vpop.xlane.xlu0 %554
  %557 = vrot.lane.b32.xlu0 %v542, 14
  %v558 = vpop.permute.xlu0 %557
  %v560 = vmul.f32 %v238, %v558
  %562 = vrot.lane.b32.xlu0 %v560, 114
  %v563 = vpop.permute.xlu0 %562
  %vm565 = vcmask 15360
  %v566 = vsel %vm565, %v563, 0.0
  %567 = vadd.xlane.f32.xlu0 %v566
  %v568 = vpop.xlane.xlu0 %567
  %v569 = vadd.f32 %v555, %v568
  %570 = vrot.lane.b32.xlu0 %v537, 16
  %v571 = vpop.permute.xlu0 %570
  %v573 = vmul.f32 %v238, %v571
  %575 = vrot.lane.b32.xlu0 %v573, 112
  %v576 = vpop.permute.xlu0 %575
  %v578 = vsel %vm552, %v576, 0.0
  %579 = vadd.xlane.f32.xlu0 %v578
  %v580 = vpop.xlane.xlu0 %579
  %581 = vrot.lane.b32.xlu0 %v542, 28
  %v582 = vpop.permute.xlu0 %581
  %v584 = vmul.f32 %v238, %v582
  %586 = vrot.lane.b32.xlu0 %v584, 100
  %v587 = vpop.permute.xlu0 %586
  %v589 = vsel %vm565, %v587, 0.0
  %590 = vadd.xlane.f32.xlu0 %v589
  %v591 = vpop.xlane.xlu0 %590
  %v592 = vadd.f32 %v580, %v591
  %vm593 = vcmask 7168
  %v594 = vsel %vm593, %v569, %v592
  %v595 = vadd.f32 %v594, %v238
  %596 = vst.msk [vmem:[%s11] sm:$0xff] %vm565, %v595
  // Predicated region
  $region46: #{tpu_custom_call.1} parent=0 // pred_check
    _
  $region47: #{tpu_custom_call.1} parent=0 // pred_check_branch
    %598 = sbr.rel (0) target = $region49
  $region48: #{tpu_custom_call.1} parent=0 // pred_region
    _
  $region49: #{tpu_custom_call.1} parent=0 // pred_fallthru
    _
  // Predicated region
  $region50: #{tpu_custom_call.1} parent=0 // pred_check
    _
  $region51: #{tpu_custom_call.1} parent=0 // pred_check_branch
    %600 = sbr.rel (0) target = $region53
  $region52: #{tpu_custom_call.1} parent=0 // pred_region
    _
  $region53: #{tpu_custom_call.1} parent=0 // pred_fallthru
    _

</llo_original>
